<compile_context>
chip_gen: v7x
topology: tpu7x:2x2x1
jax: 0.10.0
libtpu: 0.0.40
codegen_flags: <defaults>
</compile_context>

<pallas_src>
import functools

import jax
import jax.numpy as jnp
from jax.experimental import pallas as pl
from jax.experimental.pallas import tpu as pltpu

LAMB = 0.5
EPS = 1e-5


# --------------------------- one-time probes ---------------------------------

def _supports_pipeline_mode():
    """Feature probe for BlockSpec(pipeline_mode=pl.Buffered(n)); construction only."""
    if not hasattr(pl, "Buffered"):
        return False
    try:
        pl.BlockSpec((8, 128), lambda i: (0, 0), pipeline_mode=pl.Buffered(1))
        return True
    except TypeError:
        return False


_HAS_PIPELINE_MODE = _supports_pipeline_mode()


def _tpu_generation():
    """Best-effort TPU generation (5/6/7) from device_kind; defaults to 6."""
    try:
        kind = (jax.devices()[0].device_kind or "").lower()
    except Exception:
        return 6
    for g in (7, 6, 5):
        if f"v{g}" in kind:
            return g
    return 6


# ------------------------------- kernel --------------------------------------

def _prenorm_rfn_ffn_kernel(x_ref, stat_ref, w1_ref, b1_ref, w2_ref, b2_ref,
                            o_ref, *, dp, matmul_dtype, fused_stats):
    """One (tm, dp) lane-dense tile: RFN + Linear/SiLU/Linear, fully fused."""
    x = x_ref[...].astype(jnp.float32)                       # (tm, dp)

    if fused_stats:
        # Single wide MXU push: [x | x*x] @ blockdiag(seg, seg) -> [mean | E[x^2]].
        # (1/D is folded into seg.)  Stats stay in f32 operands for accuracy.
        z = jnp.concatenate([x, x * x], axis=1)              # (tm, 2*dp)
        stats = jnp.dot(z, stat_ref[...], preferred_element_type=jnp.float32)
        mean = stats[:, :dp]
        var = jnp.maximum(stats[:, dp:] - mean * mean, 0.0)  # guard tiny cancellation
        xc = x - mean
    else:
        # Two-pass fallback (numerically safest; serial mean -> var).
        mean = jnp.dot(x, stat_ref[...], preferred_element_type=jnp.float32)
        xc = x - mean
        var = jnp.dot(xc * xc, stat_ref[...], preferred_element_type=jnp.float32)

    xn = xc * jax.lax.rsqrt(var + EPS)
    y = LAMB * (xn + x)                                      # lamb == 0.5 -> 0.5*(xn + x)

    # ---- fn = FeedForward: Linear -> SiLU -> Linear (block-diag packed) ----
    y = y.astype(matmul_dtype)
    h = jnp.dot(y, w1_ref[...], preferred_element_type=jnp.float32) + b1_ref[...]
    h = h * jax.nn.sigmoid(h)                                # SiLU
    h = h.astype(matmul_dtype)
    out = jnp.dot(h, w2_ref[...], preferred_element_type=jnp.float32) + b2_ref[...]
    o_ref[...] = out.astype(o_ref.dtype)


# ----------------------- parameter packing (once per weights) ----------------

def prepare_prenorm_rfn_ffn_params(w1, b1, w2, b2, *,
                                   matmul_dtype=jnp.bfloat16, fused_stats=True):
    """Build the packed/block-diagonal operands once per weight set."""
    D, H = w1.shape
    pack = 128 // D if 128 % D == 0 else 1   # tokens per 128-lane vreg row
    dp, hp = pack * D, pack * H
    f32 = jnp.float32
    eye = jnp.eye(pack, dtype=f32)
    # Segment-mean matrix with 1/D folded in: (x2d @ seg)[:, t*D+j] == mean(token t).
    seg = jnp.kron(eye, jnp.full((D, D), 1.0 / D, f32))
    stat = jnp.kron(jnp.eye(2, dtype=f32), seg) if fused_stats else seg
    # Block-diagonal FFN weights make the packed matmuls exact (wide K/N).
    w1b = jnp.einsum("pq,dh->pdqh", eye, w1.astype(f32)).reshape(dp, hp).astype(matmul_dtype)
    w2b = jnp.einsum("pq,hd->phqd", eye, w2.astype(f32)).reshape(hp, dp).astype(matmul_dtype)
    b1b = jnp.tile(b1.astype(f32), pack).reshape(1, hp)
    b2b = jnp.tile(b2.astype(f32), pack).reshape(1, dp)
    return dict(D=D, H=H, pack=pack, dp=dp, hp=hp,
                fused_stats=fused_stats, matmul_dtype=matmul_dtype,
                stat=stat, w1b=w1b, b1b=b1b, w2b=w2b, b2b=b2b)


# ------------------------------ tile policy -----------------------------------

def _choose_row_tile(m_rows, *, target=1024, min_steps=2, prefer_even_steps=False):
    """Largest multiple-of-8 divisor of m_rows that is <= target and keeps
    >= min_steps grid steps (double-buffering / both v7x TCs have work)."""
    candidates = [t for t in range(8, m_rows + 1, 8) if m_rows % t == 0]
    if not candidates:
        return m_rows                          # full-array block is always legal
    good = [t for t in candidates if t <= target and m_rows // t >= min_steps]
    if not good:
        good = [t for t in candidates if t <= target] or [min(candidates)]
    if prefer_even_steps:
        even = [t for t in good if (m_rows // t) % 2 == 0]
        if even:
            good = even
    return max(good)


def _vmem_limit_bytes(tm, dp, hp, x_bytes, mm_bytes, fused_stats, gen):
    """Scoped-VMEM request: respect v5e's 16 MiB default and v7x's 64 MiB physical."""
    f32 = 4
    stat_dim = 2 * dp if fused_stats else dp
    io = 2 * 2 * tm * dp * x_bytes                             # double-buffered x/out tiles
    consts = stat_dim * stat_dim * f32 + 2 * dp * hp * mm_bytes + (hp + dp) * f32
    temps = 10 * tm * dp * f32 + 3 * tm * hp * f32             # rough in-kernel f32 temps
    need = io + consts + temps
    default_scoped = (16 << 20) if gen <= 5 else (32 << 20)
    cap = (48 << 20) if gen >= 7 else (100 << 20)              # v7x: 64 MiB physical
    return int(min(cap, max(default_scoped, 2 * need)))


# -------------------------------- wrapper -------------------------------------

def prenorm_rfn_ffn(x, params, *, tm=None):
    """Fused PreNorm_RFN + FeedForward forward.

    x: (..., D) tokens; params: output of prepare_prenorm_rfn_ffn_params.
    Output dtype == x.dtype (pass bf16 x for halved HBM traffic if desired).
    """
    D, pack, dp, hp = params["D"], params["pack"], params["dp"], params["hp"]
    assert x.shape[-1] == D, (x.shape, D)
    lead = x.shape[:-1]
    M = x.size // D
    x_flat = x.reshape(M, D)

    # Pad tokens so every 128-lane vreg row is fully packed (keeps all DMAs
    # and stores lane-dense instead of falling back to masked stores).
    pad = (-M) % pack
    if pad:
        x_flat = jnp.concatenate([x_flat, jnp.zeros((pad, D), x.dtype)], axis=0)
    m_rows = (M + pad) // pack
    x2d = x_flat.reshape(m_rows, dp)

    gen = _tpu_generation()
    if tm is None:
        tm = _choose_row_tile(m_rows, target=1024,
                              min_steps=4 if gen >= 7 else 2,
                              prefer_even_steps=(gen >= 7))
    assert m_rows % tm == 0, (m_rows, tm)
    grid = (m_rows // tm,)

    kernel = functools.partial(_prenorm_rfn_ffn_kernel, dp=dp,
                               matmul_dtype=params["matmul_dtype"],
                               fused_stats=params["fused_stats"])

    def const_spec(shape):
        # Grid-invariant operand: a single VMEM buffer is enough.
        if _HAS_PIPELINE_MODE:
            return pl.BlockSpec(shape, lambda i: (0, 0), pipeline_mode=pl.Buffered(1))
        return pl.BlockSpec(shape, lambda i: (0, 0))

    stat_dim = 2 * dp if params["fused_stats"] else dp
    vmem_limit = _vmem_limit_bytes(tm, dp, hp,
                                   jnp.dtype(x.dtype).itemsize,
                                   jnp.dtype(params["matmul_dtype"]).itemsize,
                                   params["fused_stats"], gen)

    out2d = pl.pallas_call(
        kernel,
        out_shape=jax.ShapeDtypeStruct((m_rows, dp), x.dtype),
        grid_spec=pltpu.PrefetchScalarGridSpec(
            num_scalar_prefetch=0,
            grid=grid,
            in_specs=[
                pl.BlockSpec((tm, dp), lambda i: (i, 0)),   # x tile (lane-dense)
                const_spec((stat_dim, stat_dim)),           # stat / segment-mean matrix
                const_spec((dp, hp)),                       # w1 (block-diag)
                const_spec((1, hp)),                        # b1
                const_spec((hp, dp)),                       # w2 (block-diag)
                const_spec((1, dp)),                        # b2
            ],
            out_specs=pl.BlockSpec((tm, dp), lambda i: (i, 0)),
        ),
        compiler_params=pltpu.CompilerParams(
            dimension_semantics=("parallel",),
            vmem_limit_bytes=vmem_limit),
    )(x2d, params["stat"], params["w1b"], params["b1b"],
      params["w2b"], params["b2b"])

    out_flat = out2d.reshape(m_rows * pack, D)
    if pad:
        out_flat = out_flat[:M]
    return out_flat.reshape(lead + (D,))


def prenorm_rfn_ffn_from_weights(x, w1, b1, w2, b2, *, matmul_dtype=jnp.bfloat16,
                                 fused_stats=True, tm=None):
    """Convenience wrapper that packs the weights on the fly."""
    params = prepare_prenorm_rfn_ffn_params(
        w1, b1, w2, b2, matmul_dtype=matmul_dtype, fused_stats=fused_stats)
    return prenorm_rfn_ffn(x, params, tm=tm)


# ------------------------------ reference -------------------------------------

def reference(x, w1, b1, w2, b2, matmul_dtype=jnp.float32):
    xf = x.astype(jnp.float32)
    mean = jnp.mean(xf, axis=-1, keepdims=True)
    xc = xf - mean
    var = jnp.mean(xc * xc, axis=-1, keepdims=True)
    xn = xc * jax.lax.rsqrt(var + EPS)
    y = (LAMB * xn + (1.0 - LAMB) * xf).astype(matmul_dtype)
    h = jnp.dot(y, w1.astype(matmul_dtype),
                preferred_element_type=jnp.float32) + b1.astype(jnp.float32)
    h = h * jax.nn.sigmoid(h)
    h = h.astype(matmul_dtype)
    out = jnp.dot(h, w2.astype(matmul_dtype),
                  preferred_element_type=jnp.float32) + b2.astype(jnp.float32)
    return out.astype(x.dtype)


if __name__ == "__main__":
    key = jax.random.PRNGKey(0)
    kx, k1, k2, k3, k4 = jax.random.split(key, 5)

    B, N, D, H = 2, 64, 32, 64   # batch, tokens, dim, mlp hidden

    x = jax.random.normal(kx, (B, N, D), dtype=jnp.float32)
    w1 = jax.random.normal(k1, (D, H), dtype=jnp.float32) * (1.0 / jnp.sqrt(D))
    b1 = jax.random.normal(k2, (H,), dtype=jnp.float32) * 0.01
    w2 = jax.random.normal(k3, (H, D), dtype=jnp.float32) * (1.0 / jnp.sqrt(H))
    b2 = jax.random.normal(k4, (D,), dtype=jnp.float32) * 0.01

    ref_f32 = reference(x, w1, b1, w2, b2, matmul_dtype=jnp.float32)

    # f32 matmuls + fused single-push stats: tight check.
    p_f32 = prepare_prenorm_rfn_ffn_params(w1, b1, w2, b2,
                                           matmul_dtype=jnp.float32, fused_stats=True)
    out = jax.block_until_ready(prenorm_rfn_ffn(x, p_f32))
    assert jnp.allclose(out, ref_f32, atol=5e-4, rtol=5e-4), "f32 fused-stats mismatch"

    # f32 matmuls, two-pass stats fallback path.
    p_f32_2p = prepare_prenorm_rfn_ffn_params(w1, b1, w2, b2,
                                              matmul_dtype=jnp.float32, fused_stats=False)
    out2 = jax.block_until_ready(prenorm_rfn_ffn(x, p_f32_2p))
    assert jnp.allclose(out2, ref_f32, atol=5e-4, rtol=5e-4), "f32 two-pass mismatch"

    # Default configuration: bf16 MXU operands for the FFN matmuls, f32 stats.
    p_bf16 = prepare_prenorm_rfn_ffn_params(w1, b1, w2, b2)   # bf16 default, fused stats
    out_bf = jax.block_until_ready(prenorm_rfn_ffn(x, p_bf16))
    ref_bf = reference(x, w1, b1, w2, b2, matmul_dtype=jnp.bfloat16)
    assert jnp.allclose(out_bf, ref_bf, atol=2e-2, rtol=2e-2), "bf16 mismatch vs bf16 ref"
    assert jnp.allclose(out_bf, ref_f32, atol=5e-2, rtol=5e-2), "bf16 mismatch vs f32 ref"

    # Larger token count: bigger tiles / multi-step grid; packed params reused.
    x_big = jax.random.normal(kx, (8, 256, D), dtype=jnp.float32)
    out_big = jax.block_until_ready(prenorm_rfn_ffn(x_big, p_bf16))
    ref_big = reference(x_big, w1, b1, w2, b2, matmul_dtype=jnp.bfloat16)
    assert jnp.allclose(out_big, ref_big, atol=2e-2, rtol=2e-2), "big-shape mismatch"

    # Ragged token count: exercises the pad-to-full-vreg-row path.
    x_odd = jax.random.normal(kx, (1, 13, D), dtype=jnp.float32)
    out_odd = jax.block_until_ready(prenorm_rfn_ffn(x_odd, p_f32))
    ref_odd = reference(x_odd, w1, b1, w2, b2, matmul_dtype=jnp.float32)
    assert jnp.allclose(out_odd, ref_odd, atol=5e-4, rtol=5e-4), "padded-shape mismatch"

    print("KERNEL_OK")
</pallas_src>

<mosaic_0001>
module attributes {stable_mosaic.version = 11 : i64} {
  func.func @_prenorm_rfn_ffn_kernel(%arg0: i32, %arg1: memref<16x128xf32, #tpu.memory_space<vmem>>, %arg2: memref<256x256xf32, #tpu.memory_space<vmem>>, %arg3: memref<128x256xf32, #tpu.memory_space<vmem>>, %arg4: memref<1x256xf32, #tpu.memory_space<vmem>>, %arg5: memref<256x128xf32, #tpu.memory_space<vmem>>, %arg6: memref<1x128xf32, #tpu.memory_space<vmem>>, %arg7: memref<16x128xf32, #tpu.memory_space<vmem>>) attributes {dimension_semantics = [#tpu.dimension_semantics<parallel>], iteration_bounds = array<i64: 2>, scalar_prefetch = 0 : i64, scratch_operands = 0 : i64, tpu.core_type = #tpu.core_type<tc>, window_params = [{transform_indices = @transform_0, window_bounds = array<i64: 16, 128>}, {pipeline_mode = #tpu.pipeline_mode<synchronous>, transform_indices = @transform_1, window_bounds = array<i64: 256, 256>}, {pipeline_mode = #tpu.pipeline_mode<synchronous>, transform_indices = @transform_2, window_bounds = array<i64: 128, 256>}, {pipeline_mode = #tpu.pipeline_mode<synchronous>, transform_indices = @transform_3, window_bounds = array<i64: 1, 256>}, {pipeline_mode = #tpu.pipeline_mode<synchronous>, transform_indices = @transform_4, window_bounds = array<i64: 256, 128>}, {pipeline_mode = #tpu.pipeline_mode<synchronous>, transform_indices = @transform_5, window_bounds = array<i64: 1, 128>}, {transform_indices = @transform_6, window_bounds = array<i64: 16, 128>}]} {
    %c0 = arith.constant 0 : index
    %c0_0 = arith.constant 0 : index
    %0 = vector.load %arg1[%c0, %c0_0] : memref<16x128xf32, #tpu.memory_space<vmem>>, vector<16x128xf32>
    %1 = arith.mulf %0, %0 : vector<16x128xf32>
    %2 = tpu.concatenate %0, %1 in 1 : vector<16x128xf32>, vector<16x128xf32> -> vector<16x256xf32>
    %c0_1 = arith.constant 0 : index
    %c0_2 = arith.constant 0 : index
    %3 = vector.load %arg2[%c0_1, %c0_2] : memref<256x256xf32, #tpu.memory_space<vmem>>, vector<256x256xf32>
    %cst = arith.constant dense<0.000000e+00> : vector<16x256xf32>
    %4 = tpu.matmul %2, %3, %cst {dimension_numbers = #tpu.dot_dimension_numbers<[1], [0], [0], [1], [0, 0, 1, 1], [], []>} : vector<16x256xf32>, vector<256x256xf32>, vector<16x256xf32> -> vector<16x256xf32>
    %5 = vector.extract_strided_slice %4 {offsets = [0, 0], sizes = [16, 128], strides = [1, 1]} : vector<16x256xf32> to vector<16x128xf32>
    %6 = vector.extract_strided_slice %4 {offsets = [0, 128], sizes = [16, 128], strides = [1, 1]} : vector<16x256xf32> to vector<16x128xf32>
    %7 = arith.mulf %5, %5 : vector<16x128xf32>
    %8 = arith.subf %6, %7 : vector<16x128xf32>
    %cst_3 = arith.constant 0.000000e+00 : f32
    %9 = vector.broadcast %cst_3 : f32 to vector<16x128xf32>
    %10 = arith.maximumf %8, %9 : vector<16x128xf32>
    %11 = arith.subf %0, %5 : vector<16x128xf32>
    %cst_4 = arith.constant 9.99999974E-6 : f32
    %12 = vector.broadcast %cst_4 : f32 to vector<16x128xf32>
    %13 = arith.addf %10, %12 : vector<16x128xf32>
    %14 = math.rsqrt %13 : vector<16x128xf32>
    %15 = arith.mulf %11, %14 : vector<16x128xf32>
    %16 = arith.addf %15, %0 : vector<16x128xf32>
    %cst_5 = arith.constant 5.000000e-01 : f32
    %17 = vector.broadcast %cst_5 : f32 to vector<16x128xf32>
    %18 = arith.mulf %17, %16 : vector<16x128xf32>
    %c0_6 = arith.constant 0 : index
    %c0_7 = arith.constant 0 : index
    %19 = vector.load %arg3[%c0_6, %c0_7] : memref<128x256xf32, #tpu.memory_space<vmem>>, vector<128x256xf32>
    %cst_8 = arith.constant dense<0.000000e+00> : vector<16x256xf32>
    %20 = tpu.matmul %18, %19, %cst_8 {dimension_numbers = #tpu.dot_dimension_numbers<[1], [0], [0], [1], [0, 0, 1, 1], [], []>} : vector<16x128xf32>, vector<128x256xf32>, vector<16x256xf32> -> vector<16x256xf32>
    %c0_9 = arith.constant 0 : index
    %c0_10 = arith.constant 0 : index
    %21 = vector.load %arg4[%c0_9, %c0_10] : memref<1x256xf32, #tpu.memory_space<vmem>>, vector<1x256xf32>
    %22 = vector.broadcast %21 : vector<1x256xf32> to vector<16x256xf32>
    %23 = arith.addf %20, %22 : vector<16x256xf32>
    %24 = arith.negf %23 : vector<16x256xf32>
    %25 = math.exp %24 : vector<16x256xf32>
    %cst_11 = arith.constant 1.000000e+00 : f32
    %26 = vector.broadcast %cst_11 : f32 to vector<16x256xf32>
    %27 = arith.addf %26, %25 : vector<16x256xf32>
    %28 = arith.divf %26, %27 : vector<16x256xf32>
    %29 = arith.mulf %23, %28 : vector<16x256xf32>
    %c0_12 = arith.constant 0 : index
    %c0_13 = arith.constant 0 : index
    %30 = vector.load %arg5[%c0_12, %c0_13] : memref<256x128xf32, #tpu.memory_space<vmem>>, vector<256x128xf32>
    %cst_14 = arith.constant dense<0.000000e+00> : vector<16x128xf32>
    %31 = tpu.matmul %29, %30, %cst_14 {dimension_numbers = #tpu.dot_dimension_numbers<[1], [0], [0], [1], [0, 0, 1, 1], [], []>} : vector<16x256xf32>, vector<256x128xf32>, vector<16x128xf32> -> vector<16x128xf32>
    %c0_15 = arith.constant 0 : index
    %c0_16 = arith.constant 0 : index
    %32 = vector.load %arg6[%c0_15, %c0_16] : memref<1x128xf32, #tpu.memory_space<vmem>>, vector<1x128xf32>
    %33 = vector.broadcast %32 : vector<1x128xf32> to vector<16x128xf32>
    %34 = arith.addf %31, %33 : vector<16x128xf32>
    %c0_17 = arith.constant 0 : index
    %c0_18 = arith.constant 0 : index
    %35 = vector.load %arg7[%c0_17, %c0_18] : memref<16x128xf32, #tpu.memory_space<vmem>>, vector<16x128xf32>
    tpu.vector_store %arg7[%c0_17, %c0_18], %34 {strides = array<i32>} : memref<16x128xf32, #tpu.memory_space<vmem>>, vector<16x128xf32>,
    return
  }
  func.func @transform_0(%arg0: i32) -> (i32, i32) {
    %c0_i32 = arith.constant 0 : i32
    %c0_i32_0 = arith.constant 0 : i32
    return %arg0, %c0_i32 : i32, i32
  }
  func.func @transform_1(%arg0: i32) -> (i32, i32) {
    %c0_i32 = arith.constant 0 : i32
    %c0_i32_0 = arith.constant 0 : i32
    %c0_i32_1 = arith.constant 0 : i32
    return %c0_i32, %c0_i32_0 : i32, i32
  }
  func.func @transform_2(%arg0: i32) -> (i32, i32) {
    %c0_i32 = arith.constant 0 : i32
    %c0_i32_0 = arith.constant 0 : i32
    %c0_i32_1 = arith.constant 0 : i32
    return %c0_i32, %c0_i32_0 : i32, i32
  }
  func.func @transform_3(%arg0: i32) -> (i32, i32) {
    %c0_i32 = arith.constant 0 : i32
    %c0_i32_0 = arith.constant 0 : i32
    %c0_i32_1 = arith.constant 0 : i32
    return %c0_i32, %c0_i32_0 : i32, i32
  }
  func.func @transform_4(%arg0: i32) -> (i32, i32) {
    %c0_i32 = arith.constant 0 : i32
    %c0_i32_0 = arith.constant 0 : i32
    %c0_i32_1 = arith.constant 0 : i32
    return %c0_i32, %c0_i32_0 : i32, i32
  }
  func.func @transform_5(%arg0: i32) -> (i32, i32) {
    %c0_i32 = arith.constant 0 : i32
    %c0_i32_0 = arith.constant 0 : i32
    %c0_i32_1 = arith.constant 0 : i32
    return %c0_i32, %c0_i32_0 : i32, i32
  }
  func.func @transform_6(%arg0: i32) -> (i32, i32) {
    %c0_i32 = arith.constant 0 : i32
    %c0_i32_0 = arith.constant 0 : i32
    return %arg0, %c0_i32 : i32, i32
  }
}

</mosaic_0001>

<llo_original>
// kernel: tpu_custom_call.1
$region0: #{tpu_custom_call.1}
  #allocation0 [shape = 'u32[]', space=smem, size = 0x4, offset = 0x4, fixed_abs, tag = 'smem constant byte address 0x4 - core index']
  #allocation1 [shape = 'u32[144,128]{1,0:T(1,128)}', space=vmem, size = 0x12000, scoped, tag = 'internal scratch']
  %s0 = inlined_call_operand.hbm [shape: f32[32,128], index: 0, kind: input, shape index: {}]
  %s1 = inlined_call_operand.hbm [shape: f32[256,256], index: 1, kind: input, shape index: {}]
  %s2 = inlined_call_operand.hbm [shape: f32[128,256], index: 2, kind: input, shape index: {}]
  %s3 = inlined_call_operand.vmem [shape: f32[1,256], index: 3, kind: input, shape index: {}]
  %s4 = inlined_call_operand.hbm [shape: f32[256,128], index: 4, kind: input, shape index: {}]
  %s5 = inlined_call_operand.vmem [shape: f32[1,128], index: 5, kind: input, shape index: {}]
  %s6 = inlined_call_operand.hbm [shape: f32[32,128], index: 6, kind: output, shape index: {}]
  %s7 = sld [smem:[#allocation0]]
  $region73: #{tpu_custom_call.1} parent=0
    _
  %s9 = ssub.s32 1, %s7
  %s10 = scalar_select 0, %s9, %s7
  $region1: #{tpu_custom_call.1} parent=0
    #allocation2 [shape = 'u8[16384]{0}', space=vmem, size = 0x4000, scoped, tag = 'input window, operand 0']
    #allocation3 [shape = 's32[2]{0}', space=sflag, size = 0x8, scoped, tag = 'scoped memory for tpu_custom_call.1']
    #allocation4 [shape = 's32[2]{0}', space=sflag, size = 0x8, scoped, tag = 'scoped memory for tpu_custom_call.1']
    #allocation5 [shape = 'u8[262144]{0}', space=vmem, size = 0x40000, scoped, tag = 'input window, operand 1, single buffered']
    #allocation6 [shape = 's32[1]{0}', space=sflag, size = 0x4, scoped, tag = 'scoped memory for tpu_custom_call.1']
    #allocation7 [shape = 'u8[131072]{0}', space=vmem, size = 0x20000, scoped, tag = 'input window, operand 2, single buffered']
    #allocation8 [shape = 'u8[131072]{0}', space=vmem, size = 0x20000, scoped, tag = 'input window, operand 4, single buffered']
    #allocation9 [shape = 's32[1]{0}', space=sflag, size = 0x4, scoped, tag = 'scoped memory for tpu_custom_call.1']
    #allocation10 [shape = 'u8[16384]{0}', space=vmem, size = 0x4000, scoped, tag = 'output window, operand 0']
    %11 = vsyncpa [#allocation3], 0
    %s12 = scalar_lea.sflag [#allocation3], 1
    %13 = vsyncpa %s12, 0
    %14 = vsyncpa [#allocation6], 0
    %15 = vsyncpa [#allocation9], 0
    %16 = vsyncpa [#allocation4], 0
    %s17 = scalar_lea.sflag [#allocation4], 1
    %18 = vsyncpa %s17, 0
    loop: start=0, step=1, limit=4
    $region2: #{tpu_custom_call.1} parent=1 // loop_pre_header
      _
    $region3: #{tpu_custom_call.1} parent=1 // loop_header
      %s20 = sphi 0, %s24
      %p21 = scmp.ge.s32.totalorder %s20, 4
      %s30 = sphi 0, %s32
      %s33 = sphi 0, %s30
      %s34 = sphi 0, %s33
      %s50 = sphi 0, %s34
      %s54 = sphi 0, %s54
      %s56 = sphi 0, %s54
      %s57 = sphi 0, %s56
      %s71 = sphi 0, %s57
      %s75 = sphi 0, %s75
      %s77 = sphi 0, %s75
      %s78 = sphi 0, %s77
      %s92 = sphi 0, %s78
      %s96 = sphi 0, %s96
      %s98 = sphi 0, %s96
      %s99 = sphi 0, %s98
      %s113 = sphi 0, %s99
      %s117 = sphi 0, %s117
      %s119 = sphi 0, %s117
      %s120 = sphi 0, %s119
      %s134 = sphi 0, %s120
      %s138 = sphi 0, %s138
      %s140 = sphi 0, %s138
      %s141 = sphi 0, %s140
      %s155 = sphi 0, %s141
      %s161 = sphi 0, %s163
      %s164 = sphi 0, %s161
      %s165 = sphi 0, %s164
      %s181 = sphi 0, %s165
    $region4: #{tpu_custom_call.1} parent=1 // loop_header_branch
      %23 = sbr.rel (%p21) target = $region8
    $region5: #{tpu_custom_call.1} parent=1 // loop_body
      %s25 = ssub.s32 %s20, 1
      %s26 = ssub.s32 %s20, 2
      %s27 = sadd.s32 %s20, 1
      %s28 = ssub.s32 %s20, %s27
      %p29 = scmp.eq.s32.totalorder %s28, 0
      %s31 = sadd.s32 %s30, 1
      %s32 = scalar_select %p29, %s30, %s31
      %p35 = pneg %p29
      %p36 = scmp.eq.s32.totalorder %s20, 1
      %p37 = por %p35, %p36
      %p38 = scmp.ne.s32.totalorder %s30, %s33
      %p39 = scmp.eq.s32.totalorder %s20, 0
      %p40 = por %p38, %p39
      %p41 = scmp.ne.s32.totalorder %s30, %s33
      %p42 = scmp.eq.s32.totalorder %s25, 1
      %p43 = por %p41, %p42
      %p44 = scmp.ne.s32.totalorder %s33, %s34
      %p45 = scmp.eq.s32.totalorder %s25, 0
      %p46 = por %p44, %p45
      %p47 = scmp.ne.s32.totalorder %s33, %s34
      %p48 = scmp.eq.s32.totalorder %s26, 1
      %p49 = por %p47, %p48
      %p51 = scmp.ne.s32.totalorder %s34, %s50
      %p52 = scmp.eq.s32.totalorder %s26, 0
      %p53 = por %p51, %p52
      %s55 = sadd.s32 %s54, 1
      %p58 = scmp.eq.s32.totalorder %s20, 1
      %p59 = scmp.ne.s32.totalorder %s54, %s56
      %p60 = scmp.eq.s32.totalorder %s20, 0
      %p61 = por %p59, %p60
      %p62 = scmp.ne.s32.totalorder %s54, %s56
      %p63 = scmp.eq.s32.totalorder %s25, 1
      %p64 = por %p62, %p63
      %p65 = scmp.ne.s32.totalorder %s56, %s57
      %p66 = scmp.eq.s32.totalorder %s25, 0
      %p67 = por %p65, %p66
      %p68 = scmp.ne.s32.totalorder %s56, %s57
      %p69 = scmp.eq.s32.totalorder %s26, 1
      %p70 = por %p68, %p69
      %p72 = scmp.ne.s32.totalorder %s57, %s71
      %p73 = scmp.eq.s32.totalorder %s26, 0
      %p74 = por %p72, %p73
      %s76 = sadd.s32 %s75, 1
      %p79 = scmp.eq.s32.totalorder %s20, 1
      %p80 = scmp.ne.s32.totalorder %s75, %s77
      %p81 = scmp.eq.s32.totalorder %s20, 0
      %p82 = por %p80, %p81
      %p83 = scmp.ne.s32.totalorder %s75, %s77
      %p84 = scmp.eq.s32.totalorder %s25, 1
      %p85 = por %p83, %p84
      %p86 = scmp.ne.s32.totalorder %s77, %s78
      %p87 = scmp.eq.s32.totalorder %s25, 0
      %p88 = por %p86, %p87
      %p89 = scmp.ne.s32.totalorder %s77, %s78
      %p90 = scmp.eq.s32.totalorder %s26, 1
      %p91 = por %p89, %p90
      %p93 = scmp.ne.s32.totalorder %s78, %s92
      %p94 = scmp.eq.s32.totalorder %s26, 0
      %p95 = por %p93, %p94
      %s97 = sadd.s32 %s96, 1
      %p100 = scmp.eq.s32.totalorder %s20, 1
      %p101 = scmp.ne.s32.totalorder %s96, %s98
      %p102 = scmp.eq.s32.totalorder %s20, 0
      %p103 = por %p101, %p102
      %p104 = scmp.ne.s32.totalorder %s96, %s98
      %p105 = scmp.eq.s32.totalorder %s25, 1
      %p106 = por %p104, %p105
      %p107 = scmp.ne.s32.totalorder %s98, %s99
      %p108 = scmp.eq.s32.totalorder %s25, 0
      %p109 = por %p107, %p108
      %p110 = scmp.ne.s32.totalorder %s98, %s99
      %p111 = scmp.eq.s32.totalorder %s26, 1
      %p112 = por %p110, %p111
      %p114 = scmp.ne.s32.totalorder %s99, %s113
      %p115 = scmp.eq.s32.totalorder %s26, 0
      %p116 = por %p114, %p115
      %s118 = sadd.s32 %s117, 1
      %p121 = scmp.eq.s32.totalorder %s20, 1
      %p122 = scmp.ne.s32.totalorder %s117, %s119
      %p123 = scmp.eq.s32.totalorder %s20, 0
      %p124 = por %p122, %p123
      %p125 = scmp.ne.s32.totalorder %s117, %s119
      %p126 = scmp.eq.s32.totalorder %s25, 1
      %p127 = por %p125, %p126
      %p128 = scmp.ne.s32.totalorder %s119, %s120
      %p129 = scmp.eq.s32.totalorder %s25, 0
      %p130 = por %p128, %p129
      %p131 = scmp.ne.s32.totalorder %s119, %s120
      %p132 = scmp.eq.s32.totalorder %s26, 1
      %p133 = por %p131, %p132
      %p135 = scmp.ne.s32.totalorder %s120, %s134
      %p136 = scmp.eq.s32.totalorder %s26, 0
      %p137 = por %p135, %p136
      %s139 = sadd.s32 %s138, 1
      %p142 = scmp.eq.s32.totalorder %s20, 1
      %p143 = scmp.ne.s32.totalorder %s138, %s140
      %p144 = scmp.eq.s32.totalorder %s20, 0
      %p145 = por %p143, %p144
      %p146 = scmp.ne.s32.totalorder %s138, %s140
      %p147 = scmp.eq.s32.totalorder %s25, 1
      %p148 = por %p146, %p147
      %p149 = scmp.ne.s32.totalorder %s140, %s141
      %p150 = scmp.eq.s32.totalorder %s25, 0
      %p151 = por %p149, %p150
      %p152 = scmp.ne.s32.totalorder %s140, %s141
      %p153 = scmp.eq.s32.totalorder %s26, 1
      %p154 = por %p152, %p153
      %p156 = scmp.ne.s32.totalorder %s141, %s155
      %p157 = scmp.eq.s32.totalorder %s26, 0
      %p158 = por %p156, %p157
      %s159 = ssub.s32 %s20, %s27
      %p160 = scmp.eq.s32.totalorder %s159, 0
      %s162 = sadd.s32 %s161, 1
      %s163 = scalar_select %p160, %s161, %s162
      %p166 = pneg %p160
      %p167 = scmp.eq.s32.totalorder %s20, 1
      %p168 = por %p166, %p167
      %p169 = scmp.ne.s32.totalorder %s161, %s164
      %p170 = scmp.eq.s32.totalorder %s20, 0
      %p171 = por %p169, %p170
      %p172 = scmp.ne.s32.totalorder %s161, %s164
      %p173 = scmp.eq.s32.totalorder %s25, 1
      %p174 = por %p172, %p173
      %p175 = scmp.ne.s32.totalorder %s164, %s165
      %p176 = scmp.eq.s32.totalorder %s25, 0
      %p177 = por %p175, %p176
      %p178 = scmp.ne.s32.totalorder %s164, %s165
      %p179 = scmp.eq.s32.totalorder %s26, 1
      %p180 = por %p178, %p179
      %p182 = scmp.ne.s32.totalorder %s165, %s181
      %p183 = scmp.eq.s32.totalorder %s26, 0
      %p184 = por %p182, %p183
      %p185 = scmp.le.s32.totalorder 1, %s20
      %p186 = scmp.lt.s32.totalorder %s20, 3
      %p187 = pnand %p185, %p186
      %p188 = pneg %p187
      // Predicated region
      $region9: #{tpu_custom_call.1} parent=5 // pred_check
        _
      $region10: #{tpu_custom_call.1} parent=5 // pred_check_branch
        %190 = sbr.rel (%p187) target = $region12
      $region11: #{tpu_custom_call.1} parent=5 // pred_region
        %s191 = ssub.s32 %s20, 1
        // Predicated region
        $region13: #{tpu_custom_call.1} parent=11 // pred_check
          %p192 = pneg %p67
        $region14: #{tpu_custom_call.1} parent=11 // pred_check_branch
          %194 = sbr.rel (%p192) target = $region16
        $region15: #{tpu_custom_call.1} parent=11 // pred_region
          %s196 = ssub.s32 8192, 8192
          %197 = vsyncadd [#allocation6], %s196
          %s198 = sshll.u32 [#allocation5], 4
          %s199 = int_to_ptr.vmem [resolvable:$true] %s198
          %204 = dma.hbm_to_vmem [thread:$0]  %s1, 8192, %s199, [#allocation6], 256, 256, 16
        $region16: #{tpu_custom_call.1} parent=11 // pred_fallthru
          _
        // Predicated region
        $region17: #{tpu_custom_call.1} parent=11 // pred_check
          %p205 = pneg %p88
        $region18: #{tpu_custom_call.1} parent=11 // pred_check_branch
          %207 = sbr.rel (%p205) target = $region20
        $region19: #{tpu_custom_call.1} parent=11 // pred_region
          %s209 = ssub.s32 4096, 4096
          %210 = vsyncadd [#allocation6], %s209
          %s211 = sshll.u32 [#allocation7], 4
          %s212 = int_to_ptr.vmem [resolvable:$true] %s211
          %217 = dma.hbm_to_vmem [thread:$0]  %s2, 4096, %s212, [#allocation6], 256, 256, 16
        $region20: #{tpu_custom_call.1} parent=11 // pred_fallthru
          _
        // Predicated region
        $region21: #{tpu_custom_call.1} parent=11 // pred_check
          %p218 = pneg %p109
        $region22: #{tpu_custom_call.1} parent=11 // pred_check_branch
          %220 = sbr.rel (%p218) target = $region24
        $region23: #{tpu_custom_call.1} parent=11 // pred_region
          _
        $region24: #{tpu_custom_call.1} parent=11 // pred_fallthru
          _
        // Predicated region
        $region25: #{tpu_custom_call.1} parent=11 // pred_check
          %p221 = pneg %p130
        $region26: #{tpu_custom_call.1} parent=11 // pred_check_branch
          %223 = sbr.rel (%p221) target = $region28
        $region27: #{tpu_custom_call.1} parent=11 // pred_region
          %s225 = ssub.s32 4096, 4096
          %226 = vsyncadd [#allocation9], %s225
          %s227 = sshll.u32 [#allocation8], 4
          %s228 = int_to_ptr.vmem [resolvable:$true] %s227
          %233 = dma.hbm_to_vmem [thread:$0]  %s4, 4096, %s228, [#allocation9], 128, 128, 8
        $region28: #{tpu_custom_call.1} parent=11 // pred_fallthru
          _
        // Predicated region
        $region29: #{tpu_custom_call.1} parent=11 // pred_check
          %p234 = pneg %p151
        $region30: #{tpu_custom_call.1} parent=11 // pred_check_branch
          %236 = sbr.rel (%p234) target = $region32
        $region31: #{tpu_custom_call.1} parent=11 // pred_region
          _
        $region32: #{tpu_custom_call.1} parent=11 // pred_fallthru
          _
      $region12: #{tpu_custom_call.1} parent=5 // pred_fallthru
        _
      %p237 = scmp.lt.s32.totalorder %s20, 2
      // Predicated region
      $region33: #{tpu_custom_call.1} parent=5 // pred_check
        %p238 = pneg %p237
      $region34: #{tpu_custom_call.1} parent=5 // pred_check_branch
        %240 = sbr.rel (%p238) target = $region36
      $region35: #{tpu_custom_call.1} parent=5 // pred_region
        // Predicated region
        $region37: #{tpu_custom_call.1} parent=35 // pred_check
          %p241 = pneg %p40
        $region38: #{tpu_custom_call.1} parent=35 // pred_check_branch
          %243 = sbr.rel (%p241) target = $region40
        $region39: #{tpu_custom_call.1} parent=35 // pred_region
          %s244 = sand.u32 %s30, 1
          %s245 = scalar_lea.sflag [#allocation3], %s244
          %s246 = sand.u32 %s30, 1
          %s247 = smul.addr %s246, 16
          %s248 = scalar_lea.vmem [#allocation2], %s247
          %s249 = smul.u32 2, %s20
          %s251 = ssub.s32 256, 256
          %252 = vsyncadd %s245, %s251
          %s253 = smul.addr %s249, 128
          %s254 = scalar_lea.hbm %s0, %s253
          %s255 = sshll.u32 %s248, 4
          %s256 = int_to_ptr.vmem [resolvable:$true] %s255
          %261 = dma.hbm_to_vmem [thread:$0]  %s254, 256, %s256, %s245, 128, 128, 8
        $region40: #{tpu_custom_call.1} parent=35 // pred_fallthru
          _
      $region36: #{tpu_custom_call.1} parent=5 // pred_fallthru
        _
      %p262 = scmp.le.s32.totalorder 1, %s20
      %p263 = scmp.lt.s32.totalorder %s20, 3
      %p264 = pnand %p262, %p263
      %p265 = pneg %p264
      // Predicated region
      $region41: #{tpu_custom_call.1} parent=5 // pred_check
        _
      $region42: #{tpu_custom_call.1} parent=5 // pred_check_branch
        %267 = sbr.rel (%p264) target = $region44
      $region43: #{tpu_custom_call.1} parent=5 // pred_region
        %s268 = ssub.s32 %s20, 1
        %s269 = sand.u32 %s33, 1
        %s270 = scalar_lea.sflag [#allocation3], %s269
        %s271 = sand.u32 %s33, 1
        %s272 = smul.addr %s271, 16
        %s273 = scalar_lea.vmem [#allocation2], %s272
        // Predicated region
        $region45: #{tpu_custom_call.1} parent=43 // pred_check
          %p274 = pneg %p46
        $region46: #{tpu_custom_call.1} parent=43 // pred_check_branch
          %276 = sbr.rel (%p274) target = $region48
        $region47: #{tpu_custom_call.1} parent=43 // pred_region
          %277 = dma.done %s270, 256
        $region48: #{tpu_custom_call.1} parent=43 // pred_fallthru
          _
        // Predicated region
        $region49: #{tpu_custom_call.1} parent=43 // pred_check
          %p278 = pneg %p67
        $region50: #{tpu_custom_call.1} parent=43 // pred_check_branch
          %280 = sbr.rel (%p278) target = $region52
        $region51: #{tpu_custom_call.1} parent=43 // pred_region
          %281 = dma.done [#allocation6], 8192
        $region52: #{tpu_custom_call.1} parent=43 // pred_fallthru
          _
        // Predicated region
        $region53: #{tpu_custom_call.1} parent=43 // pred_check
          %p282 = pneg %p88
        $region54: #{tpu_custom_call.1} parent=43 // pred_check_branch
          %284 = sbr.rel (%p282) target = $region56
        $region55: #{tpu_custom_call.1} parent=43 // pred_region
          %285 = dma.done [#allocation6], 4096
        $region56: #{tpu_custom_call.1} parent=43 // pred_fallthru
          _
        // Predicated region
        $region57: #{tpu_custom_call.1} parent=43 // pred_check
          %p286 = pneg %p130
        $region58: #{tpu_custom_call.1} parent=43 // pred_check_branch
          %288 = sbr.rel (%p286) target = $region60
        $region59: #{tpu_custom_call.1} parent=43 // pred_region
          %289 = dma.done [#allocation9], 4096
        $region60: #{tpu_custom_call.1} parent=43 // pred_fallthru
          _
        %s290 = sand.u32 %s33, 1
        %s291 = scalar_lea.sflag [#allocation3], %s290
        %s292 = sand.u32 %s33, 1
        %s293 = smul.addr %s292, 16
        %s294 = scalar_lea.vmem [#allocation2], %s293
        %p295 = pneg %p46
        %p296 = pneg %p43
        %p297 = pneg %p67
        %p298 = pneg %p64
        %p299 = pneg %p88
        %p300 = pneg %p85
        %p301 = pneg %p109
        %p302 = pneg %p106
        %p303 = pneg %p130
        %p304 = pneg %p127
        %p305 = pneg %p151
        %p306 = pneg %p148
        %p307 = pneg %p177
        %p308 = pneg %p174
        %s309 = sand.u32 %s164, 1
        %s310 = scalar_lea.sflag [#allocation4], %s309
        %s311 = sand.u32 %s164, 1
        %s312 = smul.addr %s311, 16
        %s313 = scalar_lea.vmem [#allocation10], %s312
        %s314 = smul.u32 2, %s25
        %s315 = smul.u32 2, %s25
        %v316 = vld [vmem:[%s273] sm:$0xff]
        %v317 = vld [vmem:[%s273 + $0x8] sm:$0xff]
        %v318 = vmul.f32 %v316, %v316
        %v319 = vmul.f32 %v317, %v317
        %v320 = vld [vmem:[#allocation5] sm:$0xff]
        %v321 = vld [vmem:[#allocation5 + $0x8] sm:$0xff]
        %v322 = vld [vmem:[#allocation5 + $0x10] sm:$0xff]
        %v323 = vld [vmem:[#allocation5 + $0x18] sm:$0xff]
        %v324 = vld [vmem:[#allocation5 + $0x20] sm:$0xff]
        %v325 = vld [vmem:[#allocation5 + $0x28] sm:$0xff]
        %v326 = vld [vmem:[#allocation5 + $0x30] sm:$0xff]
        %v327 = vld [vmem:[#allocation5 + $0x38] sm:$0xff]
        %v328 = vld [vmem:[#allocation5 + $0x40] sm:$0xff]
        %v329 = vld [vmem:[#allocation5 + $0x48] sm:$0xff]
        %v330 = vld [vmem:[#allocation5 + $0x50] sm:$0xff]
        %v331 = vld [vmem:[#allocation5 + $0x58] sm:$0xff]
        %v332 = vld [vmem:[#allocation5 + $0x60] sm:$0xff]
        %v333 = vld [vmem:[#allocation5 + $0x68] sm:$0xff]
        %v334 = vld [vmem:[#allocation5 + $0x70] sm:$0xff]
        %v335 = vld [vmem:[#allocation5 + $0x78] sm:$0xff]
        %v336 = vld [vmem:[#allocation5 + $0x80] sm:$0xff]
        %v337 = vld [vmem:[#allocation5 + $0x88] sm:$0xff]
        %v338 = vld [vmem:[#allocation5 + $0x90] sm:$0xff]
        %v339 = vld [vmem:[#allocation5 + $0x98] sm:$0xff]
        %v340 = vld [vmem:[#allocation5 + $0xa0] sm:$0xff]
        %v341 = vld [vmem:[#allocation5 + $0xa8] sm:$0xff]
        %v342 = vld [vmem:[#allocation5 + $0xb0] sm:$0xff]
        %v343 = vld [vmem:[#allocation5 + $0xb8] sm:$0xff]
        %v344 = vld [vmem:[#allocation5 + $0xc0] sm:$0xff]
        %v345 = vld [vmem:[#allocation5 + $0xc8] sm:$0xff]
        %v346 = vld [vmem:[#allocation5 + $0xd0] sm:$0xff]
        %v347 = vld [vmem:[#allocation5 + $0xd8] sm:$0xff]
        %v348 = vld [vmem:[#allocation5 + $0xe0] sm:$0xff]
        %v349 = vld [vmem:[#allocation5 + $0xe8] sm:$0xff]
        %v350 = vld [vmem:[#allocation5 + $0xf0] sm:$0xff]
        %v351 = vld [vmem:[#allocation5 + $0xf8] sm:$0xff]
        %v352 = vld [vmem:[#allocation5 + $0x100] sm:$0xff]
        %v353 = vld [vmem:[#allocation5 + $0x108] sm:$0xff]
        %v354 = vld [vmem:[#allocation5 + $0x110] sm:$0xff]
        %v355 = vld [vmem:[#allocation5 + $0x118] sm:$0xff]
        %v356 = vld [vmem:[#allocation5 + $0x120] sm:$0xff]
        %v357 = vld [vmem:[#allocation5 + $0x128] sm:$0xff]
        %v358 = vld [vmem:[#allocation5 + $0x130] sm:$0xff]
        %v359 = vld [vmem:[#allocation5 + $0x138] sm:$0xff]
        %v360 = vld [vmem:[#allocation5 + $0x140] sm:$0xff]
        %v361 = vld [vmem:[#allocation5 + $0x148] sm:$0xff]
        %v362 = vld [vmem:[#allocation5 + $0x150] sm:$0xff]
        %v363 = vld [vmem:[#allocation5 + $0x158] sm:$0xff]
        %v364 = vld [vmem:[#allocation5 + $0x160] sm:$0xff]
        %v365 = vld [vmem:[#allocation5 + $0x168] sm:$0xff]
        %v366 = vld [vmem:[#allocation5 + $0x170] sm:$0xff]
        %v367 = vld [vmem:[#allocation5 + $0x178] sm:$0xff]
        %v368 = vld [vmem:[#allocation5 + $0x180] sm:$0xff]
        %v369 = vld [vmem:[#allocation5 + $0x188] sm:$0xff]
        %v370 = vld [vmem:[#allocation5 + $0x190] sm:$0xff]
        %v371 = vld [vmem:[#allocation5 + $0x198] sm:$0xff]
        %v372 = vld [vmem:[#allocation5 + $0x1a0] sm:$0xff]
        %v373 = vld [vmem:[#allocation5 + $0x1a8] sm:$0xff]
        %v374 = vld [vmem:[#allocation5 + $0x1b0] sm:$0xff]
        %v375 = vld [vmem:[#allocation5 + $0x1b8] sm:$0xff]
        %v376 = vld [vmem:[#allocation5 + $0x1c0] sm:$0xff]
        %v377 = vld [vmem:[#allocation5 + $0x1c8] sm:$0xff]
        %v378 = vld [vmem:[#allocation5 + $0x1d0] sm:$0xff]
        %v379 = vld [vmem:[#allocation5 + $0x1d8] sm:$0xff]
        %v380 = vld [vmem:[#allocation5 + $0x1e0] sm:$0xff]
        %v381 = vld [vmem:[#allocation5 + $0x1e8] sm:$0xff]
        %v382 = vld [vmem:[#allocation5 + $0x1f0] sm:$0xff]
        %v383 = vld [vmem:[#allocation5 + $0x1f8] sm:$0xff]
        %384 = vmatprep.subr.mxu0 %v321
        %385 = vmatpush1.msra.mxu0 %v320
        %386 = vmatprep.subr.mxu0 %v323
        %387 = vmatpush1.msra.mxu0 %v322
        %388 = vmatprep.subr.mxu0 %v325
        %389 = vmatpush1.msra.mxu0 %v324
        %390 = vmatprep.subr.mxu0 %v327
        %391 = vmatpush1.msra.mxu0 %v326
        %392 = vmatprep.subr.mxu0 %v329
        %393 = vmatpush1.msra.mxu0 %v328
        %394 = vmatprep.subr.mxu0 %v331
        %395 = vmatpush1.msra.mxu0 %v330
        %396 = vmatprep.subr.mxu0 %v333
        %397 = vmatpush1.msra.mxu0 %v332
        %398 = vmatprep.subr.mxu0 %v335
        %399 = vmatpush1.msra.mxu0 %v334
        %400 = vmatprep.subr.mxu0 %v337
        %401 = vmatpush1.msra.mxu0 %v336
        %402 = vmatprep.subr.mxu0 %v339
        %403 = vmatpush1.msra.mxu0 %v338
        %404 = vmatprep.subr.mxu0 %v341
        %405 = vmatpush1.msra.mxu0 %v340
        %406 = vmatprep.subr.mxu0 %v343
        %407 = vmatpush1.msra.mxu0 %v342
        %408 = vmatprep.subr.mxu0 %v345
        %409 = vmatpush1.msra.mxu0 %v344
        %410 = vmatprep.subr.mxu0 %v347
        %411 = vmatpush1.msra.mxu0 %v346
        %412 = vmatprep.subr.mxu0 %v349
        %413 = vmatpush1.msra.mxu0 %v348
        %414 = vmatprep.subr.mxu0 %v351
        %415 = vmatpush1.msra.mxu0 %v350
        %416 = vmatprep.subr.mxu0 %v353
        %417 = vmatpush1.msra.mxu0 %v352
        %418 = vmatprep.subr.mxu0 %v355
        %419 = vmatpush1.msra.mxu0 %v354
        %420 = vmatprep.subr.mxu0 %v357
        %421 = vmatpush1.msra.mxu0 %v356
        %422 = vmatprep.subr.mxu0 %v359
        %423 = vmatpush1.msra.mxu0 %v358
        %424 = vmatprep.subr.mxu0 %v361
        %425 = vmatpush1.msra.mxu0 %v360
        %426 = vmatprep.subr.mxu0 %v363
        %427 = vmatpush1.msra.mxu0 %v362
        %428 = vmatprep.subr.mxu0 %v365
        %429 = vmatpush1.msra.mxu0 %v364
        %430 = vmatprep.subr.mxu0 %v367
        %431 = vmatpush1.msra.mxu0 %v366
        %432 = vmatprep.subr.mxu0 %v369
        %433 = vmatpush1.msra.mxu0 %v368
        %434 = vmatprep.subr.mxu0 %v371
        %435 = vmatpush1.msra.mxu0 %v370
        %436 = vmatprep.subr.mxu0 %v373
        %437 = vmatpush1.msra.mxu0 %v372
        %438 = vmatprep.subr.mxu0 %v375
        %439 = vmatpush1.msra.mxu0 %v374
        %440 = vmatprep.subr.mxu0 %v377
        %441 = vmatpush1.msra.mxu0 %v376
        %442 = vmatprep.subr.mxu0 %v379
        %443 = vmatpush1.msra.mxu0 %v378
        %444 = vmatprep.subr.mxu0 %v381
        %445 = vmatpush1.msra.mxu0 %v380
        %446 = vmatprep.subr.mxu0 %v383
        %447 = vmatpush1.msra.mxu0 %v382
        %448 = vmatprep.mubr.f32.mxu0 %v318
        %449 = vmatmul.mubr.f32.gmra.mrb[0].mxu0 %v316
        %v450 = vpop.f32.mrb[0].mxu0
        %v451 = vadd.f32 0.0, %v450
        %v452 = vpop.f32.mrb[0].mxu0
        %v453 = vadd.f32 0.0, %v452
        %454 = vmatprep.mubr.f32.mxu0 %v319
        %455 = vmatmul.mubr.f32.gmra.mrb[0].mxu0 %v317
        %v456 = vpop.f32.mrb[0].mxu0
        %v457 = vadd.f32 0.0, %v456
        %v458 = vpop.f32.mrb[0].mxu0
        %v459 = vadd.f32 0.0, %v458
        %460 = vdwg.mxu0
        %v461 = vmul.f32 %v451, %v451
        %v462 = vmul.f32 %v457, %v457
        %v463 = vsub.f32 %v453, %v461
        %v464 = vsub.f32 %v459, %v462
        %v465 = vmax.f32 %v463, 0.0
        %v466 = vmax.f32 %v464, 0.0
        %v467 = vsub.f32 %v316, %v451
        %v468 = vsub.f32 %v317, %v457
        %v469 = vadd.f32 %v465, 1e-05
        %v470 = vadd.f32 %v466, 1e-05
        %v471 = vrsqrt.pop %v469
        %v472 = vrsqrt.pop %v470
        %v473 = vmul.f32 %v467, %v471
        %v474 = vmul.f32 %v468, %v472
        %v475 = vadd.f32 %v473, %v316
        %v476 = vadd.f32 %v474, %v317
        %v477 = vmul.f32 %v475, 0.5
        %v478 = vmul.f32 %v476, 0.5
        %v479 = vld [vmem:[#allocation7] sm:$0xff]
        %v480 = vld [vmem:[#allocation7 + $0x8] sm:$0xff]
        %v481 = vld [vmem:[#allocation7 + $0x10] sm:$0xff]
        %v482 = vld [vmem:[#allocation7 + $0x18] sm:$0xff]
        %v483 = vld [vmem:[#allocation7 + $0x20] sm:$0xff]
        %v484 = vld [vmem:[#allocation7 + $0x28] sm:$0xff]
        %v485 = vld [vmem:[#allocation7 + $0x30] sm:$0xff]
        %v486 = vld [vmem:[#allocation7 + $0x38] sm:$0xff]
        %v487 = vld [vmem:[#allocation7 + $0x40] sm:$0xff]
        %v488 = vld [vmem:[#allocation7 + $0x48] sm:$0xff]
        %v489 = vld [vmem:[#allocation7 + $0x50] sm:$0xff]
        %v490 = vld [vmem:[#allocation7 + $0x58] sm:$0xff]
        %v491 = vld [vmem:[#allocation7 + $0x60] sm:$0xff]
        %v492 = vld [vmem:[#allocation7 + $0x68] sm:$0xff]
        %v493 = vld [vmem:[#allocation7 + $0x70] sm:$0xff]
        %v494 = vld [vmem:[#allocation7 + $0x78] sm:$0xff]
        %v495 = vld [vmem:[#allocation7 + $0x80] sm:$0xff]
        %v496 = vld [vmem:[#allocation7 + $0x88] sm:$0xff]
        %v497 = vld [vmem:[#allocation7 + $0x90] sm:$0xff]
        %v498 = vld [vmem:[#allocation7 + $0x98] sm:$0xff]
        %v499 = vld [vmem:[#allocation7 + $0xa0] sm:$0xff]
        %v500 = vld [vmem:[#allocation7 + $0xa8] sm:$0xff]
        %v501 = vld [vmem:[#allocation7 + $0xb0] sm:$0xff]
        %v502 = vld [vmem:[#allocation7 + $0xb8] sm:$0xff]
        %v503 = vld [vmem:[#allocation7 + $0xc0] sm:$0xff]
        %v504 = vld [vmem:[#allocation7 + $0xc8] sm:$0xff]
        %v505 = vld [vmem:[#allocation7 + $0xd0] sm:$0xff]
        %v506 = vld [vmem:[#allocation7 + $0xd8] sm:$0xff]
        %v507 = vld [vmem:[#allocation7 + $0xe0] sm:$0xff]
        %v508 = vld [vmem:[#allocation7 + $0xe8] sm:$0xff]
        %v509 = vld [vmem:[#allocation7 + $0xf0] sm:$0xff]
        %v510 = vld [vmem:[#allocation7 + $0xf8] sm:$0xff]
        %v511 = vld [vmem:[%s3] sm:$0x3]
        %v513 = vlaneseq
        %v514 = vshrl.u32 %v513, 7
        %v515 = vsub.s32 0, %v514
        %v516 = vrot.slane %v511, %v515
        %v517 = vlaneseq
        %v518 = vshrl.u32 %v517, 7
        %v519 = vsub.s32 1, %v518
        %v520 = vrot.slane %v511, %v519
        %523 = vmatprep.subr.mxu0 %v480
        %524 = vmatpush1.msra.mxu0 %v479
        %525 = vmatprep.subr.mxu0 %v482
        %526 = vmatpush1.msra.mxu0 %v481
        %527 = vmatprep.subr.mxu0 %v484
        %528 = vmatpush1.msra.mxu0 %v483
        %529 = vmatprep.subr.mxu0 %v486
        %530 = vmatpush1.msra.mxu0 %v485
        %531 = vmatprep.subr.mxu0 %v488
        %532 = vmatpush1.msra.mxu0 %v487
        %533 = vmatprep.subr.mxu0 %v490
        %534 = vmatpush1.msra.mxu0 %v489
        %535 = vmatprep.subr.mxu0 %v492
        %536 = vmatpush1.msra.mxu0 %v491
        %537 = vmatprep.subr.mxu0 %v494
        %538 = vmatpush1.msra.mxu0 %v493
        %539 = vmatprep.subr.mxu0 %v496
        %540 = vmatpush1.msra.mxu0 %v495
        %541 = vmatprep.subr.mxu0 %v498
        %542 = vmatpush1.msra.mxu0 %v497
        %543 = vmatprep.subr.mxu0 %v500
        %544 = vmatpush1.msra.mxu0 %v499
        %545 = vmatprep.subr.mxu0 %v502
        %546 = vmatpush1.msra.mxu0 %v501
        %547 = vmatprep.subr.mxu0 %v504
        %548 = vmatpush1.msra.mxu0 %v503
        %549 = vmatprep.subr.mxu0 %v506
        %550 = vmatpush1.msra.mxu0 %v505
        %551 = vmatprep.subr.mxu0 %v508
        %552 = vmatpush1.msra.mxu0 %v507
        %553 = vmatprep.subr.mxu0 %v510
        %554 = vmatpush1.msra.mxu0 %v509
        %555 = vmatprep.subr.mxu0 0.0
        %556 = vmatpush1.msra.mxu0 0.0
        %557 = vmatprep.subr.mxu0 0.0
        %558 = vmatpush1.msra.mxu0 0.0
        %559 = vmatprep.subr.mxu0 0.0
        %560 = vmatpush1.msra.mxu0 0.0
        %561 = vmatprep.subr.mxu0 0.0
        %562 = vmatpush1.msra.mxu0 0.0
        %563 = vmatprep.subr.mxu0 0.0
        %564 = vmatpush1.msra.mxu0 0.0
        %565 = vmatprep.subr.mxu0 0.0
        %566 = vmatpush1.msra.mxu0 0.0
        %567 = vmatprep.subr.mxu0 0.0
        %568 = vmatpush1.msra.mxu0 0.0
        %569 = vmatprep.subr.mxu0 0.0
        %570 = vmatpush1.msra.mxu0 0.0
        %571 = vmatprep.subr.mxu0 0.0
        %572 = vmatpush1.msra.mxu0 0.0
        %573 = vmatprep.subr.mxu0 0.0
        %574 = vmatpush1.msra.mxu0 0.0
        %575 = vmatprep.subr.mxu0 0.0
        %576 = vmatpush1.msra.mxu0 0.0
        %577 = vmatprep.subr.mxu0 0.0
        %578 = vmatpush1.msra.mxu0 0.0
        %579 = vmatprep.subr.mxu0 0.0
        %580 = vmatpush1.msra.mxu0 0.0
        %581 = vmatprep.subr.mxu0 0.0
        %582 = vmatpush1.msra.mxu0 0.0
        %583 = vmatprep.subr.mxu0 0.0
        %584 = vmatpush1.msra.mxu0 0.0
        %585 = vmatprep.subr.mxu0 0.0
        %586 = vmatpush1.msra.mxu0 0.0
        %587 = vmatprep.mubr.f32.mxu0 0.0
        %588 = vmatmul.mubr.f32.gmra.mrb[0].mxu0 %v477
        %v589 = vpop.f32.mrb[0].mxu0
        %v590 = vadd.f32 %v516, %v589
        %v591 = vpop.f32.mrb[0].mxu0
        %v592 = vadd.f32 %v520, %v591
        %593 = vmatprep.mubr.f32.mxu0 0.0
        %594 = vmatmul.mubr.f32.gmra.mrb[0].mxu0 %v478
        %v595 = vpop.f32.mrb[0].mxu0
        %v596 = vadd.f32 %v516, %v595
        %v597 = vpop.f32.mrb[0].mxu0
        %v598 = vadd.f32 %v520, %v597
        %599 = vdwg.mxu0
        %v600 = vxor.u32 %v590, 2147483648
        %v601 = vxor.u32 %v592, 2147483648
        %v602 = vxor.u32 %v596, 2147483648
        %v603 = vxor.u32 %v598, 2147483648
        %v604 = vmul.f32 %v600, 1.442695
        %v605 = vpow.pop %v604
        %v606 = vmul.f32 %v601, 1.442695
        %v607 = vpow.pop %v606
        %v608 = vmul.f32 %v602, 1.442695
        %v609 = vpow.pop %v608
        %v610 = vmul.f32 %v603, 1.442695
        %v611 = vpow.pop %v610
        %v612 = vadd.f32 %v605, 1.0
        %v613 = vadd.f32 %v607, 1.0
        %v614 = vadd.f32 %v609, 1.0
        %v615 = vadd.f32 %v611, 1.0
        %v616 = vrcp.pop %v612
        %v617 = vmul.f32 1.0, %v616
        %v618 = vrcp.pop %v613
        %v619 = vmul.f32 1.0, %v618
        %v620 = vrcp.pop %v614
        %v621 = vmul.f32 1.0, %v620
        %v622 = vrcp.pop %v615
        %v623 = vmul.f32 1.0, %v622
        %v624 = vmul.f32 %v590, %v617
        %v625 = vmul.f32 %v592, %v619
        %v626 = vmul.f32 %v596, %v621
        %v627 = vmul.f32 %v598, %v623
        %v628 = vld [vmem:[#allocation8] sm:$0xff]
        %v629 = vld [vmem:[#allocation8 + $0x8] sm:$0xff]
        %v630 = vld [vmem:[#allocation8 + $0x10] sm:$0xff]
        %v631 = vld [vmem:[#allocation8 + $0x18] sm:$0xff]
        %v632 = vld [vmem:[#allocation8 + $0x20] sm:$0xff]
        %v633 = vld [vmem:[#allocation8 + $0x28] sm:$0xff]
        %v634 = vld [vmem:[#allocation8 + $0x30] sm:$0xff]
        %v635 = vld [vmem:[#allocation8 + $0x38] sm:$0xff]
        %v636 = vld [vmem:[#allocation8 + $0x40] sm:$0xff]
        %v637 = vld [vmem:[#allocation8 + $0x48] sm:$0xff]
        %v638 = vld [vmem:[#allocation8 + $0x50] sm:$0xff]
        %v639 = vld [vmem:[#allocation8 + $0x58] sm:$0xff]
        %v640 = vld [vmem:[#allocation8 + $0x60] sm:$0xff]
        %v641 = vld [vmem:[#allocation8 + $0x68] sm:$0xff]
        %v642 = vld [vmem:[#allocation8 + $0x70] sm:$0xff]
        %v643 = vld [vmem:[#allocation8 + $0x78] sm:$0xff]
        %v644 = vld [vmem:[#allocation8 + $0x80] sm:$0xff]
        %v645 = vld [vmem:[#allocation8 + $0x88] sm:$0xff]
        %v646 = vld [vmem:[#allocation8 + $0x90] sm:$0xff]
        %v647 = vld [vmem:[#allocation8 + $0x98] sm:$0xff]
        %v648 = vld [vmem:[#allocation8 + $0xa0] sm:$0xff]
        %v649 = vld [vmem:[#allocation8 + $0xa8] sm:$0xff]
        %v650 = vld [vmem:[#allocation8 + $0xb0] sm:$0xff]
        %v651 = vld [vmem:[#allocation8 + $0xb8] sm:$0xff]
        %v652 = vld [vmem:[#allocation8 + $0xc0] sm:$0xff]
        %v653 = vld [vmem:[#allocation8 + $0xc8] sm:$0xff]
        %v654 = vld [vmem:[#allocation8 + $0xd0] sm:$0xff]
        %v655 = vld [vmem:[#allocation8 + $0xd8] sm:$0xff]
        %v656 = vld [vmem:[#allocation8 + $0xe0] sm:$0xff]
        %v657 = vld [vmem:[#allocation8 + $0xe8] sm:$0xff]
        %v658 = vld [vmem:[#allocation8 + $0xf0] sm:$0xff]
        %v659 = vld [vmem:[#allocation8 + $0xf8] sm:$0xff]
        %v660 = vld [vmem:[%s5] sm:$0x1]
        %v662 = vlaneseq
        %v663 = vshrl.u32 %v662, 7
        %v664 = vsub.s32 0, %v663
        %v665 = vrot.slane %v660, %v664
        %667 = vmatprep.subr.mxu0 0.0
        %668 = vmatpush1.msra.mxu0 %v628
        %669 = vmatprep.subr.mxu0 0.0
        %670 = vmatpush1.msra.mxu0 %v629
        %671 = vmatprep.subr.mxu0 0.0
        %672 = vmatpush1.msra.mxu0 %v630
        %673 = vmatprep.subr.mxu0 0.0
        %674 = vmatpush1.msra.mxu0 %v631
        %675 = vmatprep.subr.mxu0 0.0
        %676 = vmatpush1.msra.mxu0 %v632
        %677 = vmatprep.subr.mxu0 0.0
        %678 = vmatpush1.msra.mxu0 %v633
        %679 = vmatprep.subr.mxu0 0.0
        %680 = vmatpush1.msra.mxu0 %v634
        %681 = vmatprep.subr.mxu0 0.0
        %682 = vmatpush1.msra.mxu0 %v635
        %683 = vmatprep.subr.mxu0 0.0
        %684 = vmatpush1.msra.mxu0 %v636
        %685 = vmatprep.subr.mxu0 0.0
        %686 = vmatpush1.msra.mxu0 %v637
        %687 = vmatprep.subr.mxu0 0.0
        %688 = vmatpush1.msra.mxu0 %v638
        %689 = vmatprep.subr.mxu0 0.0
        %690 = vmatpush1.msra.mxu0 %v639
        %691 = vmatprep.subr.mxu0 0.0
        %692 = vmatpush1.msra.mxu0 %v640
        %693 = vmatprep.subr.mxu0 0.0
        %694 = vmatpush1.msra.mxu0 %v641
        %695 = vmatprep.subr.mxu0 0.0
        %696 = vmatpush1.msra.mxu0 %v642
        %697 = vmatprep.subr.mxu0 0.0
        %698 = vmatpush1.msra.mxu0 %v643
        %699 = vmatprep.subr.mxu0 0.0
        %700 = vmatpush1.msra.mxu0 %v644
        %701 = vmatprep.subr.mxu0 0.0
        %702 = vmatpush1.msra.mxu0 %v645
        %703 = vmatprep.subr.mxu0 0.0
        %704 = vmatpush1.msra.mxu0 %v646
        %705 = vmatprep.subr.mxu0 0.0
        %706 = vmatpush1.msra.mxu0 %v647
        %707 = vmatprep.subr.mxu0 0.0
        %708 = vmatpush1.msra.mxu0 %v648
        %709 = vmatprep.subr.mxu0 0.0
        %710 = vmatpush1.msra.mxu0 %v649
        %711 = vmatprep.subr.mxu0 0.0
        %712 = vmatpush1.msra.mxu0 %v650
        %713 = vmatprep.subr.mxu0 0.0
        %714 = vmatpush1.msra.mxu0 %v651
        %715 = vmatprep.subr.mxu0 0.0
        %716 = vmatpush1.msra.mxu0 %v652
        %717 = vmatprep.subr.mxu0 0.0
        %718 = vmatpush1.msra.mxu0 %v653
        %719 = vmatprep.subr.mxu0 0.0
        %720 = vmatpush1.msra.mxu0 %v654
        %721 = vmatprep.subr.mxu0 0.0
        %722 = vmatpush1.msra.mxu0 %v655
        %723 = vmatprep.subr.mxu0 0.0
        %724 = vmatpush1.msra.mxu0 %v656
        %725 = vmatprep.subr.mxu0 0.0
        %726 = vmatpush1.msra.mxu0 %v657
        %727 = vmatprep.subr.mxu0 0.0
        %728 = vmatpush1.msra.mxu0 %v658
        %729 = vmatprep.subr.mxu0 0.0
        %730 = vmatpush1.msra.mxu0 %v659
        %731 = vmatprep.mubr.f32.mxu0 %v625
        %732 = vmatmul.mubr.f32.gmra.mrb[0].mxu0 %v624
        %v733 = vpop.f32.mrb[0].mxu0
        %v734 = vadd.f32 %v665, %v733
        %v735 = vpop.f32.mrb[0].mxu0
        %736 = vmatprep.mubr.f32.mxu0 %v627
        %737 = vmatmul.mubr.f32.gmra.mrb[0].mxu0 %v626
        %v738 = vpop.f32.mrb[0].mxu0
        %v739 = vadd.f32 %v665, %v738
        %v740 = vpop.f32.mrb[0].mxu0
        %741 = vdwg.mxu0
        %742 = vst [vmem:[%s313] sm:$0xff] %v734
        %743 = vst [vmem:[%s313 + $0x8] sm:$0xff] %v739
        %s744 = sand.u32 %s164, 1
        %s745 = scalar_lea.sflag [#allocation4], %s744
        %s746 = sand.u32 %s164, 1
        %s747 = smul.addr %s746, 16
        %s748 = scalar_lea.vmem [#allocation10], %s747
        // Predicated region
        $region61: #{tpu_custom_call.1} parent=43 // pred_check
          %p749 = pneg %p174
        $region62: #{tpu_custom_call.1} parent=43 // pred_check_branch
          %751 = sbr.rel (%p749) target = $region64
        $region63: #{tpu_custom_call.1} parent=43 // pred_region
          %s752 = smul.u32 2, %s25
          %s754 = ssub.s32 256, 256
          %755 = vsyncadd %s745, %s754
          %s756 = smul.addr %s752, 128
          %s757 = scalar_lea.hbm %s6, %s756
          %s758 = sshll.u32 %s748, 4
          %s759 = int_to_ptr.vmem [resolvable:$true] %s758
          %764 = dma.vmem_to_hbm [thread:$0]  %s759, 256, %s757, %s745, 128, 128, 8
        $region64: #{tpu_custom_call.1} parent=43 // pred_fallthru
          _
      $region44: #{tpu_custom_call.1} parent=5 // pred_fallthru
        _
      %p765 = scmp.le.s32.totalorder 2, %s20
      // Predicated region
      $region65: #{tpu_custom_call.1} parent=5 // pred_check
        %p766 = pneg %p765
      $region66: #{tpu_custom_call.1} parent=5 // pred_check_branch
        %768 = sbr.rel (%p766) target = $region68
      $region67: #{tpu_custom_call.1} parent=5 // pred_region
        %s769 = ssub.s32 %s20, 2
        // Predicated region
        $region69: #{tpu_custom_call.1} parent=67 // pred_check
          %p770 = pneg %p180
        $region70: #{tpu_custom_call.1} parent=67 // pred_check_branch
          %772 = sbr.rel (%p770) target = $region72
        $region71: #{tpu_custom_call.1} parent=67 // pred_region
          %s773 = sand.u32 %s165, 1
          %s774 = scalar_lea.sflag [#allocation4], %s773
          %s775 = sand.u32 %s165, 1
          %s776 = smul.addr %s775, 16
          %s777 = scalar_lea.vmem [#allocation10], %s776
          %778 = dma.done %s774, 256
        $region72: #{tpu_custom_call.1} parent=67 // pred_fallthru
          _
      $region68: #{tpu_custom_call.1} parent=5 // pred_fallthru
        _
    $region6: #{tpu_custom_call.1} parent=1 // loop_footer
      %s24 = sadd.s32 1, %s20
    $region7: #{tpu_custom_call.1} parent=1 // loop_footer_branch
      %19 = sbr.rel target = $region3
    $region8: #{tpu_custom_call.1} parent=1 // loop_exit
      _
    %779 = vsyncpa [#allocation3], 1
    %s780 = scalar_lea.sflag [#allocation3], 1
    %781 = vsyncpa %s780, 1
    %782 = vsyncpa [#allocation6], 1
    %783 = vsyncpa [#allocation9], 1
    %784 = vsyncpa [#allocation4], 1
    %s785 = scalar_lea.sflag [#allocation4], 1
    %786 = vsyncpa %s785, 1

</llo_original>
